<compile_context>
chip_gen: v7x
topology: tpu7x:2x2x1
jax: 0.10.0
libtpu: 0.0.40
codegen_flags: <defaults>
</compile_context>

<pallas_src>
import math

import jax
import jax.numpy as jnp
from jax.experimental import pallas as pl
from jax.experimental.pallas import tpu as pltpu


def _round_up(n, m):
    return ((n + m - 1) // m) * m


def _linear_t(h, w, b):
    """h: (K, tb) lane-major activations; w: (M, K); b: (M, 1).  Returns (M, tb).

    Unrolled VPU outer-product accumulation (exact f32), no MXU.
    """
    acc = w[:, 0:1] * h[0:1, :]
    for k in range(1, w.shape[1]):
        acc = acc + w[:, k:k+1] * h[k:k+1, :]
    return acc + b


def fnn_kernel(x_ref, w1_ref, b1_ref, w2_ref, b2_ref, w3_ref, b3_ref, o_ref):
    # (tb, F) -> (F, tb): one XLU transpose moves the batch onto the lane axis.
    x_t = x_ref[...].T

    # Hidden layer 1 + ReLU, hidden layer 2 + ReLU (all f32 VPU math, batch on lanes).
    h = jnp.maximum(_linear_t(x_t, w1_ref[...], b1_ref[...]), 0.0)   # (H1, tb)
    h = jnp.maximum(_linear_t(h, w2_ref[...], b2_ref[...]), 0.0)     # (H2, tb)

    # Output layer (output_layer_fn='Linear': no activation).  Lane-dense store.
    o_ref[...] = _linear_t(h, w3_ref[...], b3_ref[...]).astype(o_ref.dtype)


def fnn_forward(x, params, *, block_b=16384):
    """x: (B, input_size) float32.  params: w_i (out,in), b_i (out,1).  Returns (B, out)."""
    w1, b1 = params["w1"], params["b1"]
    w2, b2 = params["w2"], params["b2"]
    w3, b3 = params["w3"], params["b3"]

    B, F = x.shape
    out_dim = w3.shape[0]

    # Batch tile: a multiple of 128 when tiled (legal + lane-dense output), and at
    # most ~half the batch so that large B gives grid >= 2 (both v7x TensorCores).
    block_b = max(128, (block_b // 128) * 128)
    tb = min(block_b, _round_up(pl.cdiv(B, 2), 128))
    if tb >= B:
        tb = B                      # single full-array tile (small batches)
    grid = (pl.cdiv(B, tb),)

    n_mac = w1.size + w2.size + w3.size          # 34 for the default sizes
    cost = pl.CostEstimate(
        flops=2 * B * n_mac,
        transcendentals=0,
        bytes_accessed=4 * (B * (F + out_dim) + n_mac + b1.size + b2.size + b3.size),
    )

    const = lambda i: (0, 0)        # weights/biases: fetched once, VMEM-resident.
    out_t = pl.pallas_call(
        fnn_kernel,
        out_shape=jax.ShapeDtypeStruct((out_dim, B), jnp.float32),
        grid=grid,
        in_specs=[
            pl.BlockSpec((tb, F), lambda i: (i, 0)),   # x row-block, pipelined
            pl.BlockSpec(w1.shape, const),
            pl.BlockSpec(b1.shape, const),
            pl.BlockSpec(w2.shape, const),
            pl.BlockSpec(b2.shape, const),
            pl.BlockSpec(w3.shape, const),
            pl.BlockSpec(b3.shape, const),
        ],
        out_specs=pl.BlockSpec((out_dim, tb), lambda i: (0, i)),   # lane-dense output
        compiler_params=pltpu.CompilerParams(
            dimension_semantics=("parallel",),          # shard batch over v7x's 2 TCs
            vmem_limit_bytes=48 * 1024 * 1024,          # <= v7x's 64 MiB physical VMEM
        ),
        cost_estimate=cost,
    )(x, w1, b1, w2, b2, w3, b3)

    if out_dim == 1:
        return out_t.reshape(B, 1)   # memory-order-preserving; no transpose pass
    return out_t.T


def init_linear(key, fan_in, fan_out):
    """PyTorch-style nn.Linear init (uniform +-1/sqrt(fan_in))."""
    kw, kb = jax.random.split(key)
    bound = 1.0 / math.sqrt(fan_in)
    w = jax.random.uniform(kw, (fan_out, fan_in), jnp.float32, -bound, bound)  # (out, in)
    b = jax.random.uniform(kb, (fan_out, 1), jnp.float32, -bound, bound)       # (out, 1)
    return w, b


def make_params(key, input_size=6, hidden_sizes=(4, 2), output_size=1):
    k1, k2, k3 = jax.random.split(key, 3)
    w1, b1 = init_linear(k1, input_size, hidden_sizes[0])
    w2, b2 = init_linear(k2, hidden_sizes[0], hidden_sizes[1])
    w3, b3 = init_linear(k3, hidden_sizes[1], output_size)
    return {"w1": w1, "b1": b1, "w2": w2, "b2": b2, "w3": w3, "b3": b3}


def fnn_reference(x, p):
    """Exact-f32 elementwise reference (avoids default bf16 matmul precision)."""
    def lin(h, w, b):
        return jnp.sum(h[:, None, :] * w[None, :, :], axis=-1) + b.T
    h = jnp.maximum(lin(x, p["w1"], p["b1"]), 0.0)
    h = jnp.maximum(lin(h, p["w2"], p["b2"]), 0.0)
    return lin(h, p["w3"], p["b3"])


if __name__ == "__main__":
    key = jax.random.PRNGKey(0)
    kx, kp, kx2 = jax.random.split(key, 3)

    input_size, hidden_sizes, output_size = 6, (4, 2), 1
    params = make_params(kp, input_size=input_size,
                         hidden_sizes=hidden_sizes, output_size=output_size)

    # Small case matching the module defaults (single grid step, tb == B).
    batch = 8
    x = jax.random.normal(kx, (batch, input_size), jnp.float32)
    out = jax.block_until_ready(fnn_forward(x, params))
    ref = fnn_reference(x, params)
    assert out.shape == (batch, output_size), out.shape
    assert jnp.allclose(out, ref, atol=1e-5, rtol=1e-5), "mismatch vs reference (small)"

    # Larger case exercising the batch grid: tb=256, grid=(2,) incl. a partial tile.
    batch2 = 300
    x2 = jax.random.normal(kx2, (batch2, input_size), jnp.float32)
    out2 = jax.block_until_ready(fnn_forward(x2, params))
    ref2 = fnn_reference(x2, params)
    assert out2.shape == (batch2, output_size), out2.shape
    assert jnp.allclose(out2, ref2, atol=1e-5, rtol=1e-5), "mismatch vs reference (tiled)"

    print("KERNEL_OK")
</pallas_src>

<mosaic_0001>
module attributes {stable_mosaic.version = 11 : i64} {
  func.func @fnn_kernel(%arg0: i32, %arg1: memref<8x6xf32, #tpu.memory_space<vmem>>, %arg2: memref<4x6xf32, #tpu.memory_space<vmem>>, %arg3: memref<4x1xf32, #tpu.memory_space<vmem>>, %arg4: memref<2x4xf32, #tpu.memory_space<vmem>>, %arg5: memref<2x1xf32, #tpu.memory_space<vmem>>, %arg6: memref<1x2xf32, #tpu.memory_space<vmem>>, %arg7: memref<1x1xf32, #tpu.memory_space<vmem>>, %arg8: memref<1x8xf32, #tpu.memory_space<vmem>>) attributes {dimension_semantics = [#tpu.dimension_semantics<parallel>], iteration_bounds = array<i64: 1>, scalar_prefetch = 0 : i64, scratch_operands = 0 : i64, tpu.core_type = #tpu.core_type<tc>, window_params = [{transform_indices = @transform_0, window_bounds = array<i64: 8, 6>}, {pipeline_mode = #tpu.pipeline_mode<synchronous>, transform_indices = @transform_1, window_bounds = array<i64: 4, 6>}, {pipeline_mode = #tpu.pipeline_mode<synchronous>, transform_indices = @transform_2, window_bounds = array<i64: 4, 1>}, {pipeline_mode = #tpu.pipeline_mode<synchronous>, transform_indices = @transform_3, window_bounds = array<i64: 2, 4>}, {pipeline_mode = #tpu.pipeline_mode<synchronous>, transform_indices = @transform_4, window_bounds = array<i64: 2, 1>}, {pipeline_mode = #tpu.pipeline_mode<synchronous>, transform_indices = @transform_5, window_bounds = array<i64: 1, 2>}, {pipeline_mode = #tpu.pipeline_mode<synchronous>, transform_indices = @transform_6, window_bounds = array<i64: 1, 1>}, {transform_indices = @transform_7, window_bounds = array<i64: 1, 8>}]} {
    %c0 = arith.constant 0 : index
    %c0_0 = arith.constant 0 : index
    %0 = vector.load %arg1[%c0, %c0_0] : memref<8x6xf32, #tpu.memory_space<vmem>>, vector<8x6xf32>
    %1 = tpu.transpose %0, [1, 0] : vector<8x6xf32> -> vector<6x8xf32>
    %c0_1 = arith.constant 0 : index
    %c0_2 = arith.constant 0 : index
    %2 = vector.load %arg2[%c0_1, %c0_2] : memref<4x6xf32, #tpu.memory_space<vmem>>, vector<4x6xf32>
    %c0_3 = arith.constant 0 : index
    %c0_4 = arith.constant 0 : index
    %3 = vector.load %arg3[%c0_3, %c0_4] : memref<4x1xf32, #tpu.memory_space<vmem>>, vector<4x1xf32>
    %4 = vector.extract_strided_slice %2 {offsets = [0, 0], sizes = [4, 1], strides = [1, 1]} : vector<4x6xf32> to vector<4x1xf32>
    %5 = vector.extract_strided_slice %1 {offsets = [0, 0], sizes = [1, 8], strides = [1, 1]} : vector<6x8xf32> to vector<1x8xf32>
    %6 = vector.broadcast %4 : vector<4x1xf32> to vector<4x8xf32>
    %7 = vector.broadcast %5 : vector<1x8xf32> to vector<4x8xf32>
    %8 = arith.mulf %6, %7 : vector<4x8xf32>
    %9 = vector.extract_strided_slice %2 {offsets = [0, 1], sizes = [4, 1], strides = [1, 1]} : vector<4x6xf32> to vector<4x1xf32>
    %10 = vector.extract_strided_slice %1 {offsets = [1, 0], sizes = [1, 8], strides = [1, 1]} : vector<6x8xf32> to vector<1x8xf32>
    %11 = vector.broadcast %9 : vector<4x1xf32> to vector<4x8xf32>
    %12 = vector.broadcast %10 : vector<1x8xf32> to vector<4x8xf32>
    %13 = arith.mulf %11, %12 : vector<4x8xf32>
    %14 = arith.addf %8, %13 : vector<4x8xf32>
    %15 = vector.extract_strided_slice %2 {offsets = [0, 2], sizes = [4, 1], strides = [1, 1]} : vector<4x6xf32> to vector<4x1xf32>
    %16 = vector.extract_strided_slice %1 {offsets = [2, 0], sizes = [1, 8], strides = [1, 1]} : vector<6x8xf32> to vector<1x8xf32>
    %17 = vector.broadcast %15 : vector<4x1xf32> to vector<4x8xf32>
    %18 = vector.broadcast %16 : vector<1x8xf32> to vector<4x8xf32>
    %19 = arith.mulf %17, %18 : vector<4x8xf32>
    %20 = arith.addf %14, %19 : vector<4x8xf32>
    %21 = vector.extract_strided_slice %2 {offsets = [0, 3], sizes = [4, 1], strides = [1, 1]} : vector<4x6xf32> to vector<4x1xf32>
    %22 = vector.extract_strided_slice %1 {offsets = [3, 0], sizes = [1, 8], strides = [1, 1]} : vector<6x8xf32> to vector<1x8xf32>
    %23 = vector.broadcast %21 : vector<4x1xf32> to vector<4x8xf32>
    %24 = vector.broadcast %22 : vector<1x8xf32> to vector<4x8xf32>
    %25 = arith.mulf %23, %24 : vector<4x8xf32>
    %26 = arith.addf %20, %25 : vector<4x8xf32>
    %27 = vector.extract_strided_slice %2 {offsets = [0, 4], sizes = [4, 1], strides = [1, 1]} : vector<4x6xf32> to vector<4x1xf32>
    %28 = vector.extract_strided_slice %1 {offsets = [4, 0], sizes = [1, 8], strides = [1, 1]} : vector<6x8xf32> to vector<1x8xf32>
    %29 = vector.broadcast %27 : vector<4x1xf32> to vector<4x8xf32>
    %30 = vector.broadcast %28 : vector<1x8xf32> to vector<4x8xf32>
    %31 = arith.mulf %29, %30 : vector<4x8xf32>
    %32 = arith.addf %26, %31 : vector<4x8xf32>
    %33 = vector.extract_strided_slice %2 {offsets = [0, 5], sizes = [4, 1], strides = [1, 1]} : vector<4x6xf32> to vector<4x1xf32>
    %34 = vector.extract_strided_slice %1 {offsets = [5, 0], sizes = [1, 8], strides = [1, 1]} : vector<6x8xf32> to vector<1x8xf32>
    %35 = vector.broadcast %33 : vector<4x1xf32> to vector<4x8xf32>
    %36 = vector.broadcast %34 : vector<1x8xf32> to vector<4x8xf32>
    %37 = arith.mulf %35, %36 : vector<4x8xf32>
    %38 = arith.addf %32, %37 : vector<4x8xf32>
    %39 = vector.broadcast %3 : vector<4x1xf32> to vector<4x8xf32>
    %40 = arith.addf %38, %39 : vector<4x8xf32>
    %cst = arith.constant 0.000000e+00 : f32
    %41 = vector.broadcast %cst : f32 to vector<4x8xf32>
    %42 = arith.maximumf %40, %41 : vector<4x8xf32>
    %c0_5 = arith.constant 0 : index
    %c0_6 = arith.constant 0 : index
    %43 = vector.load %arg4[%c0_5, %c0_6] : memref<2x4xf32, #tpu.memory_space<vmem>>, vector<2x4xf32>
    %c0_7 = arith.constant 0 : index
    %c0_8 = arith.constant 0 : index
    %44 = vector.load %arg5[%c0_7, %c0_8] : memref<2x1xf32, #tpu.memory_space<vmem>>, vector<2x1xf32>
    %45 = vector.extract_strided_slice %43 {offsets = [0, 0], sizes = [2, 1], strides = [1, 1]} : vector<2x4xf32> to vector<2x1xf32>
    %46 = vector.extract_strided_slice %42 {offsets = [0, 0], sizes = [1, 8], strides = [1, 1]} : vector<4x8xf32> to vector<1x8xf32>
    %47 = vector.broadcast %45 : vector<2x1xf32> to vector<2x8xf32>
    %48 = vector.broadcast %46 : vector<1x8xf32> to vector<2x8xf32>
    %49 = arith.mulf %47, %48 : vector<2x8xf32>
    %50 = vector.extract_strided_slice %43 {offsets = [0, 1], sizes = [2, 1], strides = [1, 1]} : vector<2x4xf32> to vector<2x1xf32>
    %51 = vector.extract_strided_slice %42 {offsets = [1, 0], sizes = [1, 8], strides = [1, 1]} : vector<4x8xf32> to vector<1x8xf32>
    %52 = vector.broadcast %50 : vector<2x1xf32> to vector<2x8xf32>
    %53 = vector.broadcast %51 : vector<1x8xf32> to vector<2x8xf32>
    %54 = arith.mulf %52, %53 : vector<2x8xf32>
    %55 = arith.addf %49, %54 : vector<2x8xf32>
    %56 = vector.extract_strided_slice %43 {offsets = [0, 2], sizes = [2, 1], strides = [1, 1]} : vector<2x4xf32> to vector<2x1xf32>
    %57 = vector.extract_strided_slice %42 {offsets = [2, 0], sizes = [1, 8], strides = [1, 1]} : vector<4x8xf32> to vector<1x8xf32>
    %58 = vector.broadcast %56 : vector<2x1xf32> to vector<2x8xf32>
    %59 = vector.broadcast %57 : vector<1x8xf32> to vector<2x8xf32>
    %60 = arith.mulf %58, %59 : vector<2x8xf32>
    %61 = arith.addf %55, %60 : vector<2x8xf32>
    %62 = vector.extract_strided_slice %43 {offsets = [0, 3], sizes = [2, 1], strides = [1, 1]} : vector<2x4xf32> to vector<2x1xf32>
    %63 = vector.extract_strided_slice %42 {offsets = [3, 0], sizes = [1, 8], strides = [1, 1]} : vector<4x8xf32> to vector<1x8xf32>
    %64 = vector.broadcast %62 : vector<2x1xf32> to vector<2x8xf32>
    %65 = vector.broadcast %63 : vector<1x8xf32> to vector<2x8xf32>
    %66 = arith.mulf %64, %65 : vector<2x8xf32>
    %67 = arith.addf %61, %66 : vector<2x8xf32>
    %68 = vector.broadcast %44 : vector<2x1xf32> to vector<2x8xf32>
    %69 = arith.addf %67, %68 : vector<2x8xf32>
    %cst_9 = arith.constant 0.000000e+00 : f32
    %70 = vector.broadcast %cst_9 : f32 to vector<2x8xf32>
    %71 = arith.maximumf %69, %70 : vector<2x8xf32>
    %c0_10 = arith.constant 0 : index
    %c0_11 = arith.constant 0 : index
    %72 = vector.load %arg6[%c0_10, %c0_11] : memref<1x2xf32, #tpu.memory_space<vmem>>, vector<1x2xf32>
    %c0_12 = arith.constant 0 : index
    %c0_13 = arith.constant 0 : index
    %73 = vector.load %arg7[%c0_12, %c0_13] : memref<1x1xf32, #tpu.memory_space<vmem>>, vector<1x1xf32>
    %74 = vector.extract_strided_slice %72 {offsets = [0, 0], sizes = [1, 1], strides = [1, 1]} : vector<1x2xf32> to vector<1x1xf32>
    %75 = vector.extract_strided_slice %71 {offsets = [0, 0], sizes = [1, 8], strides = [1, 1]} : vector<2x8xf32> to vector<1x8xf32>
    %76 = vector.broadcast %74 : vector<1x1xf32> to vector<1x8xf32>
    %77 = arith.mulf %76, %75 : vector<1x8xf32>
    %78 = vector.extract_strided_slice %72 {offsets = [0, 1], sizes = [1, 1], strides = [1, 1]} : vector<1x2xf32> to vector<1x1xf32>
    %79 = vector.extract_strided_slice %71 {offsets = [1, 0], sizes = [1, 8], strides = [1, 1]} : vector<2x8xf32> to vector<1x8xf32>
    %80 = vector.broadcast %78 : vector<1x1xf32> to vector<1x8xf32>
    %81 = arith.mulf %80, %79 : vector<1x8xf32>
    %82 = arith.addf %77, %81 : vector<1x8xf32>
    %83 = vector.broadcast %73 : vector<1x1xf32> to vector<1x8xf32>
    %84 = arith.addf %82, %83 : vector<1x8xf32>
    %c0_14 = arith.constant 0 : index
    %c0_15 = arith.constant 0 : index
    %85 = vector.load %arg8[%c0_14, %c0_15] : memref<1x8xf32, #tpu.memory_space<vmem>>, vector<1x8xf32>
    tpu.vector_store %arg8[%c0_14, %c0_15], %84 {strides = array<i32>} : memref<1x8xf32, #tpu.memory_space<vmem>>, vector<1x8xf32>,
    return
  }
  func.func @transform_0(%arg0: i32) -> (i32, i32) {
    %c0_i32 = arith.constant 0 : i32
    %c0_i32_0 = arith.constant 0 : i32
    return %arg0, %c0_i32 : i32, i32
  }
  func.func @transform_1(%arg0: i32) -> (i32, i32) {
    %c0_i32 = arith.constant 0 : i32
    %c0_i32_0 = arith.constant 0 : i32
    %c0_i32_1 = arith.constant 0 : i32
    return %c0_i32, %c0_i32_0 : i32, i32
  }
  func.func @transform_2(%arg0: i32) -> (i32, i32) {
    %c0_i32 = arith.constant 0 : i32
    %c0_i32_0 = arith.constant 0 : i32
    %c0_i32_1 = arith.constant 0 : i32
    return %c0_i32, %c0_i32_0 : i32, i32
  }
  func.func @transform_3(%arg0: i32) -> (i32, i32) {
    %c0_i32 = arith.constant 0 : i32
    %c0_i32_0 = arith.constant 0 : i32
    %c0_i32_1 = arith.constant 0 : i32
    return %c0_i32, %c0_i32_0 : i32, i32
  }
  func.func @transform_4(%arg0: i32) -> (i32, i32) {
    %c0_i32 = arith.constant 0 : i32
    %c0_i32_0 = arith.constant 0 : i32
    %c0_i32_1 = arith.constant 0 : i32
    return %c0_i32, %c0_i32_0 : i32, i32
  }
  func.func @transform_5(%arg0: i32) -> (i32, i32) {
    %c0_i32 = arith.constant 0 : i32
    %c0_i32_0 = arith.constant 0 : i32
    %c0_i32_1 = arith.constant 0 : i32
    return %c0_i32, %c0_i32_0 : i32, i32
  }
  func.func @transform_6(%arg0: i32) -> (i32, i32) {
    %c0_i32 = arith.constant 0 : i32
    %c0_i32_0 = arith.constant 0 : i32
    %c0_i32_1 = arith.constant 0 : i32
    return %c0_i32, %c0_i32_0 : i32, i32
  }
  func.func @transform_7(%arg0: i32) -> (i32, i32) {
    %c0_i32 = arith.constant 0 : i32
    %c0_i32_0 = arith.constant 0 : i32
    return %c0_i32, %arg0 : i32, i32
  }
}

</mosaic_0001>

<llo_original>
// kernel: tpu_custom_call.1
$region0: #{tpu_custom_call.1}
  #allocation0 [shape = 'u32[]', space=smem, size = 0x4, offset = 0x4, fixed_abs, tag = 'smem constant byte address 0x4 - core index']
  #allocation1 [shape = 'u32[144,128]{1,0:T(1,128)}', space=vmem, size = 0x12000, scoped, tag = 'internal scratch']
  #allocation2 [shape = 'f32[1,1]{1,0:T(1,128)S(1)}', space=vmem, size = 0x200, scoped, tag = 'scoped memory for tpu_custom_call.1']
  %s0 = inlined_call_operand.vmem [shape: f32[8,6], index: 0, kind: input, shape index: {}]
  %s1 = inlined_call_operand.vmem [shape: f32[4,6], index: 1, kind: input, shape index: {}]
  %s2 = inlined_call_operand.vmem [shape: f32[4,1], index: 2, kind: input, shape index: {}]
  %s3 = inlined_call_operand.vmem [shape: f32[2,4], index: 3, kind: input, shape index: {}]
  %s4 = inlined_call_operand.vmem [shape: f32[2,1], index: 4, kind: input, shape index: {}]
  %s5 = inlined_call_operand.vmem [shape: f32[1,2], index: 5, kind: input, shape index: {}]
  %s6 = inlined_call_operand.<no memory space> [shape: f32[1,1], index: 6, kind: input, shape index: {}]
  %s7 = inlined_call_operand.hbm [shape: f32[1,8], index: 7, kind: output, shape index: {}]
  %s8 = sld [smem:[#allocation0]]
  $region38: #{tpu_custom_call.1} parent=0
    _
  %s10 = ssub.s32 1, %s8
  %s11 = scalar_select 0, %s10, %s8
  %v12 = vstv %s6
  %13 = vst [vmem:[#allocation2] sm:$0x1] %v12
  $region1: #{tpu_custom_call.1} parent=0
    #allocation3 [shape = 'u8[512]{0}', space=vmem, size = 0x400, scoped, tag = 'output window, operand 0, single buffered']
    #allocation4 [shape = 's32[1]{0}', space=sflag, size = 0x4, scoped, tag = 'scoped memory for tpu_custom_call.1']
    %14 = vsyncpa [#allocation4], 0
    // Predicated region
    $region2: #{tpu_custom_call.1} parent=1 // pred_check
      _
    $region3: #{tpu_custom_call.1} parent=1 // pred_check_branch
      %16 = sbr.rel (0) target = $region5
    $region4: #{tpu_custom_call.1} parent=1 // pred_region
      _
    $region5: #{tpu_custom_call.1} parent=1 // pred_fallthru
      _
    // Predicated region
    $region6: #{tpu_custom_call.1} parent=1 // pred_check
      _
    $region7: #{tpu_custom_call.1} parent=1 // pred_check_branch
      %18 = sbr.rel (0) target = $region9
    $region8: #{tpu_custom_call.1} parent=1 // pred_region
      _
    $region9: #{tpu_custom_call.1} parent=1 // pred_fallthru
      _
    // Predicated region
    $region10: #{tpu_custom_call.1} parent=1 // pred_check
      _
    $region11: #{tpu_custom_call.1} parent=1 // pred_check_branch
      %20 = sbr.rel (0) target = $region13
    $region12: #{tpu_custom_call.1} parent=1 // pred_region
      _
    $region13: #{tpu_custom_call.1} parent=1 // pred_fallthru
      _
    // Predicated region
    $region14: #{tpu_custom_call.1} parent=1 // pred_check
      _
    $region15: #{tpu_custom_call.1} parent=1 // pred_check_branch
      %22 = sbr.rel (0) target = $region17
    $region16: #{tpu_custom_call.1} parent=1 // pred_region
      _
    $region17: #{tpu_custom_call.1} parent=1 // pred_fallthru
      _
    // Predicated region
    $region18: #{tpu_custom_call.1} parent=1 // pred_check
      _
    $region19: #{tpu_custom_call.1} parent=1 // pred_check_branch
      %24 = sbr.rel (0) target = $region21
    $region20: #{tpu_custom_call.1} parent=1 // pred_region
      _
    $region21: #{tpu_custom_call.1} parent=1 // pred_fallthru
      _
    // Predicated region
    $region22: #{tpu_custom_call.1} parent=1 // pred_check
      _
    $region23: #{tpu_custom_call.1} parent=1 // pred_check_branch
      %26 = sbr.rel (0) target = $region25
    $region24: #{tpu_custom_call.1} parent=1 // pred_region
      _
    $region25: #{tpu_custom_call.1} parent=1 // pred_fallthru
      _
    // Predicated region
    $region26: #{tpu_custom_call.1} parent=1 // pred_check
      _
    $region27: #{tpu_custom_call.1} parent=1 // pred_check_branch
      %28 = sbr.rel (0) target = $region29
    $region28: #{tpu_custom_call.1} parent=1 // pred_region
      _
    $region29: #{tpu_custom_call.1} parent=1 // pred_fallthru
      _
    %v29 = vld [vmem:[%s0] sm:$0xff]
    %30 = vxpose.xlu0.b32.start [1/16] %v29, 128
    %31 = vxpose.xlu0.b32.cont [2/16] 0.0, 128
    %32 = vxpose.xlu0.b32.cont [3/16] 0.0, 128
    %33 = vxpose.xlu0.b32.cont [4/16] 0.0, 128
    %34 = vxpose.xlu0.b32.cont [5/16] 0.0, 128
    %35 = vxpose.xlu0.b32.cont [6/16] 0.0, 128
    %36 = vxpose.xlu0.b32.cont [7/16] 0.0, 128
    %37 = vxpose.xlu0.b32.cont [8/16] 0.0, 128
    %38 = vxpose.xlu0.b32.cont [9/16] 0.0, 128
    %39 = vxpose.xlu0.b32.cont [10/16] 0.0, 128
    %40 = vxpose.xlu0.b32.cont [11/16] 0.0, 128
    %41 = vxpose.xlu0.b32.cont [12/16] 0.0, 128
    %42 = vxpose.xlu0.b32.cont [13/16] 0.0, 128
    %43 = vxpose.xlu0.b32.cont [14/16] 0.0, 128
    %44 = vxpose.xlu0.b32.cont [15/16] 0.0, 128
    %45 = vxpose.xlu0.b32.end [16/16] 0.0, 128
    %v46 = vpop.trf.xlu0
    %v47 = vpop.trf.xlu0
    %v48 = vpop.trf.xlu0
    %v49 = vpop.trf.xlu0
    %v50 = vpop.trf.xlu0
    %v51 = vpop.trf.xlu0
    %v52 = vpop.trf.xlu0
    %v53 = vpop.trf.xlu0
    %v54 = vpop.trf.xlu0
    %v55 = vpop.trf.xlu0
    %v56 = vpop.trf.xlu0
    %v57 = vpop.trf.xlu0
    %v58 = vpop.trf.xlu0
    %v59 = vpop.trf.xlu0
    %v60 = vpop.trf.xlu0
    %v61 = vpop.trf.xlu0
    %v62 = vld [vmem:[%s1] sm:$0xf]
    %v63 = vld [vmem:[%s2] sm:$0xf]
    %65 = vset.pattern.permute.xlu0 0
    %66 = vperm.xlu0 %65, %v62
    %v67 = vpop.permute.xlu0 %66
    %v69 = vlaneseq
    %v70 = vshrl.u32 %v69, 7
    %v71 = vsub.s32 0, %v70
    %v72 = vrot.slane %v46, %v71
    %v73 = vmul.f32 %v67, %v72
    %74 = vset.pattern.permute.xlu0 1
    %75 = vperm.xlu0 %74, %v62
    %v76 = vpop.permute.xlu0 %75
    %v78 = vlaneseq
    %v79 = vshrl.u32 %v78, 7
    %v80 = vsub.s32 1, %v79
    %v81 = vrot.slane %v46, %v80
    %v82 = vmul.f32 %v76, %v81
    %v83 = vadd.f32 %v73, %v82
    %84 = vset.pattern.permute.xlu0 2
    %85 = vperm.xlu0 %84, %v62
    %v86 = vpop.permute.xlu0 %85
    %v88 = vlaneseq
    %v89 = vshrl.u32 %v88, 7
    %v90 = vsub.s32 2, %v89
    %v91 = vrot.slane %v46, %v90
    %v92 = vmul.f32 %v86, %v91
    %v93 = vadd.f32 %v83, %v92
    %94 = vset.pattern.permute.xlu0 3
    %95 = vperm.xlu0 %94, %v62
    %v96 = vpop.permute.xlu0 %95
    %v98 = vlaneseq
    %v99 = vshrl.u32 %v98, 7
    %v100 = vsub.s32 3, %v99
    %v101 = vrot.slane %v46, %v100
    %v102 = vmul.f32 %v96, %v101
    %v103 = vadd.f32 %v93, %v102
    %104 = vset.pattern.permute.xlu0 4
    %105 = vperm.xlu0 %104, %v62
    %v106 = vpop.permute.xlu0 %105
    %v108 = vlaneseq
    %v109 = vshrl.u32 %v108, 7
    %v110 = vsub.s32 4, %v109
    %v111 = vrot.slane %v46, %v110
    %v112 = vmul.f32 %v106, %v111
    %v113 = vadd.f32 %v103, %v112
    %114 = vset.pattern.permute.xlu0 5
    %115 = vperm.xlu0 %114, %v62
    %v116 = vpop.permute.xlu0 %115
    %v118 = vlaneseq
    %v119 = vshrl.u32 %v118, 7
    %v120 = vsub.s32 5, %v119
    %v121 = vrot.slane %v46, %v120
    %v122 = vmul.f32 %v116, %v121
    %v123 = vadd.f32 %v113, %v122
    %125 = vset.pattern.permute.xlu0 0
    %126 = vperm.xlu0 %125, %v63
    %v127 = vpop.permute.xlu0 %126
    %v129 = vadd.f32 %v123, %v127
    %v130 = vmax.f32 %v129, 0.0
    %v131 = vld [vmem:[%s3] sm:$0x3]
    %v132 = vld [vmem:[%s4] sm:$0x3]
    %134 = vset.pattern.permute.xlu0 0
    %135 = vperm.xlu0 %134, %v131
    %v136 = vpop.permute.xlu0 %135
    %v138 = vlaneseq
    %v139 = vshrl.u32 %v138, 7
    %v140 = vsub.s32 0, %v139
    %v141 = vrot.slane %v130, %v140
    %v142 = vmul.f32 %v136, %v141
    %143 = vset.pattern.permute.xlu0 1
    %144 = vperm.xlu0 %143, %v131
    %v145 = vpop.permute.xlu0 %144
    %v147 = vlaneseq
    %v148 = vshrl.u32 %v147, 7
    %v149 = vsub.s32 1, %v148
    %v150 = vrot.slane %v130, %v149
    %v151 = vmul.f32 %v145, %v150
    %v152 = vadd.f32 %v142, %v151
    %153 = vset.pattern.permute.xlu0 2
    %154 = vperm.xlu0 %153, %v131
    %v155 = vpop.permute.xlu0 %154
    %v157 = vlaneseq
    %v158 = vshrl.u32 %v157, 7
    %v159 = vsub.s32 2, %v158
    %v160 = vrot.slane %v130, %v159
    %v161 = vmul.f32 %v155, %v160
    %v162 = vadd.f32 %v152, %v161
    %163 = vset.pattern.permute.xlu0 3
    %164 = vperm.xlu0 %163, %v131
    %v165 = vpop.permute.xlu0 %164
    %v167 = vlaneseq
    %v168 = vshrl.u32 %v167, 7
    %v169 = vsub.s32 3, %v168
    %v170 = vrot.slane %v130, %v169
    %v171 = vmul.f32 %v165, %v170
    %v172 = vadd.f32 %v162, %v171
    %174 = vset.pattern.permute.xlu0 0
    %175 = vperm.xlu0 %174, %v132
    %v176 = vpop.permute.xlu0 %175
    %v178 = vadd.f32 %v172, %v176
    %v179 = vmax.f32 %v178, 0.0
    %v180 = vld [vmem:[%s5] sm:$0x1]
    %v181 = vld [vmem:[#allocation2] sm:$0x1]
    %183 = vset.pattern.permute.xlu0 0
    %184 = vperm.xlu0 %183, %v180
    %v185 = vpop.permute.xlu0 %184
    %v187 = vlaneseq
    %v188 = vshrl.u32 %v187, 7
    %v189 = vsub.s32 0, %v188
    %v190 = vrot.slane %v185, %v189
    %v191 = vmul.f32 %v190, %v179
    %192 = vset.pattern.permute.xlu0 1
    %193 = vperm.xlu0 %192, %v180
    %v194 = vpop.permute.xlu0 %193
    %v196 = vlaneseq
    %v197 = vshrl.u32 %v196, 7
    %v198 = vsub.s32 0, %v197
    %v199 = vrot.slane %v194, %v198
    %v200 = vmul.f32 %v199, %v179
    %v202 = vrot.slane %v200, 1
    %v204 = vadd.f32 %v191, %v202
    %206 = vset.pattern.permute.xlu0 0
    %207 = vperm.xlu0 %206, %v181
    %v208 = vpop.permute.xlu0 %207
    %v210 = vlaneseq
    %v211 = vshrl.u32 %v210, 7
    %v212 = vsub.s32 0, %v211
    %v213 = vrot.slane %v208, %v212
    %v214 = vadd.f32 %v204, %v213
    %vm215 = vcmask 57344
    %216 = vst.msk [vmem:[#allocation3] sm:$0x1] %vm215, %v214
    // Predicated region
    $region30: #{tpu_custom_call.1} parent=1 // pred_check
      _
    $region31: #{tpu_custom_call.1} parent=1 // pred_check_branch
      %218 = sbr.rel (0) target = $region33
    $region32: #{tpu_custom_call.1} parent=1 // pred_region
      %s220 = ssub.s32 16, 16
      %221 = vsyncadd [#allocation4], %s220
      %s223 = sshll.u32 [#allocation3], 4
      %s224 = int_to_ptr.vmem [resolvable:$true] %s223
      %226 = dma.vmem_to_hbm [thread:$0]  %s224, 16, %s7, [#allocation4]
    $region33: #{tpu_custom_call.1} parent=1 // pred_fallthru
      _
    // Predicated region
    $region34: #{tpu_custom_call.1} parent=1 // pred_check
      _
    $region35: #{tpu_custom_call.1} parent=1 // pred_check_branch
      %228 = sbr.rel (0) target = $region37
    $region36: #{tpu_custom_call.1} parent=1 // pred_region
      %229 = dma.done [#allocation4], 16
    $region37: #{tpu_custom_call.1} parent=1 // pred_fallthru
      _
    %230 = vsyncpa [#allocation4], 1

</llo_original>
